<compile_context>
chip_gen: v5e
topology: v5e:2x2
jax: 0.10.0
libtpu: 0.0.40
codegen_flags: <defaults>
</compile_context>

<pallas_src>
import functools
import math

import jax
import jax.numpy as jnp
from jax import lax
from jax.experimental import pallas as pl
from jax.experimental.pallas import tpu as pltpu


_CHUNK_ROWS = 256            # rows per inner-loop step (keeps live vregs < 64)
_MAX_BLOCK_ROWS = 24576      # rows per grid step (~3 MB f32 HBM, ~12.6 MiB VMEM/buffer)
_SMALL_N = 4096              # below this, use a single full-extent block
_VMEM_LIMIT_BYTES = 40 * 1024 * 1024


def _round_up(a, b):
    return ((a + b - 1) // b) * b


def _dot_last_dim_kernel(w_ref, x_ref, o_ref, *, chunk_rows, num_chunks, tail_rows):
    # w_ref: (K, 1)  f32 in VMEM (lane-broadcast weight column, resident)
    # x_ref: (R, K)  input dtype, natural row-major layout (rows on sublanes)
    # o_ref: (C, chunk_rows) f32; chunk-row c holds dots of rows [c*chunk, (c+1)*chunk)
    w = w_ref[...]  # hoisted out of the loop

    def process(c, r0, rows):
        xc = x_ref[pl.ds(r0, rows), :].astype(jnp.float32)   # (rows, K)  VMEM load (+cast)
        xt = jnp.transpose(xc)                               # (K, rows)  XLU relayout (idle unit)
        dots = jnp.sum(xt * w, axis=0, keepdims=True)        # (1, rows)  VPU mul + sublane sum
        o_ref[pl.ds(c, 1), 0:rows] = dots                    # lane-dense store

    if num_chunks > 0:
        def body(c, carry):
            r0 = pl.multiple_of(c * chunk_rows, chunk_rows)
            process(c, r0, chunk_rows)
            return carry
        lax.fori_loop(0, num_chunks, body, 0)

    if tail_rows > 0:  # only in the single-block (small N) case
        process(num_chunks, num_chunks * chunk_rows, tail_rows)


def augmentation_dot_product(x, weights):
    """x: (..., K), weights: (K,) -> (...,) float32 (dot over last dim)."""
    k = weights.shape[0]
    assert x.shape[-1] == k
    lead_shape = x.shape[:-1]
    n = int(math.prod(lead_shape)) if lead_shape else 1
    if n == 0:
        return jnp.zeros(lead_shape, dtype=jnp.float32)

    # Copy-free views only: flatten leading dims, keep the native input dtype.
    x2d = x.reshape(n, k)
    w2d = jnp.asarray(weights, jnp.float32).reshape(k, 1)

    chunk = _CHUNK_ROWS
    if n <= _SMALL_N:
        # Single full-extent block (any n allowed), ragged tail handled in-kernel.
        block_rows = n
        num_chunks, tail_rows = divmod(n, chunk)
        cpb = pl.cdiv(n, chunk)
    else:
        # >=2 blocks so v7x megacore gets work; block_rows multiple of 2048 so the
        # output block's sublane dim (block_rows/256) is a multiple of 8.
        block_rows = min(_MAX_BLOCK_ROWS, _round_up(pl.cdiv(n, 2), 8 * chunk))
        num_chunks, tail_rows = block_rows // chunk, 0
        cpb = block_rows // chunk

    out_rows = pl.cdiv(n, chunk)
    num_blocks = pl.cdiv(n, block_rows)

    kernel = functools.partial(
        _dot_last_dim_kernel,
        chunk_rows=chunk, num_chunks=num_chunks, tail_rows=tail_rows)

    out = pl.pallas_call(
        kernel,
        out_shape=jax.ShapeDtypeStruct((out_rows, chunk), jnp.float32),
        grid=(num_blocks,),
        in_specs=[
            pl.BlockSpec((k, 1), lambda i: (0, 0)),            # weights (tiny, resident)
            pl.BlockSpec((block_rows, k), lambda i: (i, 0)),   # natural row-major rows
        ],
        out_specs=pl.BlockSpec((cpb, chunk), lambda i: (i, 0)),
        compiler_params=pltpu.CompilerParams(
            dimension_semantics=("parallel",),
            vmem_limit_bytes=_VMEM_LIMIT_BYTES,
        ),
        cost_estimate=pl.CostEstimate(
            flops=2 * n * k,
            transcendentals=0,
            bytes_accessed=n * k * x2d.dtype.itemsize + n * 4 + k * 4,
        ),
    )(w2d, x2d)

    # Output buffer is padded up to a multiple of `chunk` elements; slice (only
    # when ragged — this touches N*4 bytes, ~1/30 of the input traffic).
    out_flat = out.reshape(-1)
    if out_flat.shape[0] != n:
        out_flat = out_flat[:n]
    # Note: output dtype is float32 (module's weights are f32 parameters).
    return out_flat.reshape(lead_shape)


if __name__ == "__main__":
    key = jax.random.PRNGKey(0)
    k_w, k_x, k_x2 = jax.random.split(key, 3)

    # Deterministic "parameter" init matching torch.randn(30) / sqrt(30).
    weights = jax.random.normal(k_w, (30,), dtype=jnp.float32) / math.sqrt(30.0)

    fwd = jax.jit(augmentation_dot_product)

    # Small example input consistent with the forward: (..., 30).
    x = jax.random.normal(k_x, (2, 8, 30), dtype=jnp.float32)
    y = jax.block_until_ready(fwd(x, weights))
    y_ref = jnp.einsum("bsk,k->bs", x, weights)
    assert y.shape == (2, 8)
    assert jnp.allclose(y, y_ref, atol=1e-5, rtol=1e-5)

    # Larger check: exercises the multi-block grid, the inner chunk loop and
    # the masked (ragged) last block.
    x2 = jax.random.normal(k_x2, (70, 128, 30), dtype=jnp.float32)
    y2 = jax.block_until_ready(fwd(x2, weights))
    y2_ref = jnp.einsum("bsk,k->bs", x2, weights)
    assert y2.shape == (70, 128)
    assert jnp.allclose(y2, y2_ref, atol=1e-5, rtol=1e-5)

    print("KERNEL_OK")
</pallas_src>

<mosaic_0001>
module attributes {stable_mosaic.version = 11 : i64} {
  func.func @_dot_last_dim_kernel(%arg0: i32, %arg1: memref<30x1xf32, #tpu.memory_space<vmem>>, %arg2: memref<16x30xf32, #tpu.memory_space<vmem>>, %arg3: memref<1x256xf32, #tpu.memory_space<vmem>>) attributes {dimension_semantics = [#tpu.dimension_semantics<parallel>], iteration_bounds = array<i64: 1>, scalar_prefetch = 0 : i64, scratch_operands = 0 : i64, tpu.core_type = #tpu.core_type<tc>, window_params = [{pipeline_mode = #tpu.pipeline_mode<synchronous>, transform_indices = @transform_0, window_bounds = array<i64: 30, 1>}, {transform_indices = @transform_1, window_bounds = array<i64: 16, 30>}, {transform_indices = @transform_2, window_bounds = array<i64: 1, 256>}]} {
    %c0 = arith.constant 0 : index
    %c0_0 = arith.constant 0 : index
    %0 = vector.load %arg1[%c0, %c0_0] : memref<30x1xf32, #tpu.memory_space<vmem>>, vector<30x1xf32>
    %c0_1 = arith.constant 0 : index
    %c0_2 = arith.constant 0 : index
    %1 = vector.load %arg2[%c0_1, %c0_2] : memref<16x30xf32, #tpu.memory_space<vmem>>, vector<16x30xf32>
    %2 = tpu.transpose %1, [1, 0] : vector<16x30xf32> -> vector<30x16xf32>
    %3 = vector.broadcast %0 : vector<30x1xf32> to vector<30x16xf32>
    %4 = arith.mulf %2, %3 : vector<30x16xf32>
    %cst = arith.constant dense<0.000000e+00> : vector<16xf32>
    %5 = vector.multi_reduction <add>, %4, %cst [0] : vector<30x16xf32> to vector<16xf32>
    %6 = vector.shape_cast %5 : vector<16xf32> to vector<1x16xf32>
    %c0_3 = arith.constant 0 : index
    %c0_4 = arith.constant 0 : index
    %7 = vector.load %arg3[%c0_3, %c0_4] : memref<1x256xf32, #tpu.memory_space<vmem>>, vector<1x16xf32>
    tpu.vector_store %arg3[%c0_3, %c0_4], %6 {strides = array<i32>} : memref<1x256xf32, #tpu.memory_space<vmem>>, vector<1x16xf32>,
    return
  }
  func.func @transform_0(%arg0: i32) -> (i32, i32) {
    %c0_i32 = arith.constant 0 : i32
    %c0_i32_0 = arith.constant 0 : i32
    %c0_i32_1 = arith.constant 0 : i32
    return %c0_i32, %c0_i32_0 : i32, i32
  }
  func.func @transform_1(%arg0: i32) -> (i32, i32) {
    %c0_i32 = arith.constant 0 : i32
    %c0_i32_0 = arith.constant 0 : i32
    return %arg0, %c0_i32 : i32, i32
  }
  func.func @transform_2(%arg0: i32) -> (i32, i32) {
    %c0_i32 = arith.constant 0 : i32
    %c0_i32_0 = arith.constant 0 : i32
    return %arg0, %c0_i32 : i32, i32
  }
}

</mosaic_0001>

<llo_original>
// kernel: augmentation_dot_product.1
$region0: #{augmentation_dot_product.1}
  #allocation0 [shape = 'u32[]', space=smem, size = 0x4, offset = 0x4, fixed_abs, tag = 'smem constant byte address 0x4 - core index']
  #allocation1 [shape = 'u32[72,128]{1,0:T(1,128)}', space=vmem, size = 0x9000, scoped, tag = 'internal scratch']
  %s0 = inlined_call_operand.vmem [shape: f32[30,1], index: 0, kind: input, shape index: {}]
  %s1 = inlined_call_operand.vmem [shape: f32[16,30], index: 1, kind: input, shape index: {}]
  %s2 = inlined_call_operand.vmem [shape: f32[1,256], index: 2, kind: output, shape index: {}]
  %s3 = sld [smem:[#allocation0]]
  $region18: #{augmentation_dot_product.1} parent=0
    _
  %s5 = ssub.s32 1, %s3
  %s6 = scalar_select 0, %s5, %s3
  // Predicated region
  $region2: #{augmentation_dot_product.1} parent=0 // pred_check
    _
  $region3: #{augmentation_dot_product.1} parent=0 // pred_check_branch
    %8 = sbr.rel (0) target = $region5
  $region4: #{augmentation_dot_product.1} parent=0 // pred_region
    _
  $region5: #{augmentation_dot_product.1} parent=0 // pred_fallthru
    _
  // Predicated region
  $region6: #{augmentation_dot_product.1} parent=0 // pred_check
    _
  $region7: #{augmentation_dot_product.1} parent=0 // pred_check_branch
    %10 = sbr.rel (0) target = $region9
  $region8: #{augmentation_dot_product.1} parent=0 // pred_region
    _
  $region9: #{augmentation_dot_product.1} parent=0 // pred_fallthru
    _
  %v11 = vld [vmem:[%s0] sm:$0xff]
  %v12 = vld [vmem:[%s0 + $0x8] sm:$0xff]
  %v13 = vld [vmem:[%s0 + $0x10] sm:$0xff]
  %v14 = vld [vmem:[%s0 + $0x18] sm:$0x3f]
  %v15 = vld [vmem:[%s1] sm:$0xff]
  %v16 = vld [vmem:[%s1 + $0x8] sm:$0xff]
  %17 = vxpose.xlu0.b32.start [1/16] %v15, 128
  %18 = vxpose.xlu0.b32.cont [2/16] %v16, 128
  %19 = vxpose.xlu0.b32.cont [3/16] 0.0, 128
  %20 = vxpose.xlu0.b32.cont [4/16] 0.0, 128
  %21 = vxpose.xlu0.b32.cont [5/16] 0.0, 128
  %22 = vxpose.xlu0.b32.cont [6/16] 0.0, 128
  %23 = vxpose.xlu0.b32.cont [7/16] 0.0, 128
  %24 = vxpose.xlu0.b32.cont [8/16] 0.0, 128
  %25 = vxpose.xlu0.b32.cont [9/16] 0.0, 128
  %26 = vxpose.xlu0.b32.cont [10/16] 0.0, 128
  %27 = vxpose.xlu0.b32.cont [11/16] 0.0, 128
  %28 = vxpose.xlu0.b32.cont [12/16] 0.0, 128
  %29 = vxpose.xlu0.b32.cont [13/16] 0.0, 128
  %30 = vxpose.xlu0.b32.cont [14/16] 0.0, 128
  %31 = vxpose.xlu0.b32.cont [15/16] 0.0, 128
  %32 = vxpose.xlu0.b32.end [16/16] 0.0, 128
  %v33 = vpop.trf.xlu0
  %v34 = vpop.trf.xlu0
  %v35 = vpop.trf.xlu0
  %v36 = vpop.trf.xlu0
  %v37 = vpop.trf.xlu0
  %v38 = vpop.trf.xlu0
  %v39 = vpop.trf.xlu0
  %v40 = vpop.trf.xlu0
  %v41 = vpop.trf.xlu0
  %v42 = vpop.trf.xlu0
  %v43 = vpop.trf.xlu0
  %v44 = vpop.trf.xlu0
  %v45 = vpop.trf.xlu0
  %v46 = vpop.trf.xlu0
  %v47 = vpop.trf.xlu0
  %v48 = vpop.trf.xlu0
  %50 = vset.pattern.permute.xlu0 0
  %51 = vperm.xlu0 %50, %v11
  %v52 = vpop.permute.xlu0 %51
  %55 = vset.pattern.permute.xlu0 0
  %56 = vperm.xlu0 %55, %v12
  %v57 = vpop.permute.xlu0 %56
  %60 = vset.pattern.permute.xlu0 0
  %61 = vperm.xlu0 %60, %v13
  %v62 = vpop.permute.xlu0 %61
  %65 = vset.pattern.permute.xlu0 0
  %66 = vperm.xlu0 %65, %v14
  %v67 = vpop.permute.xlu0 %66
  %v69 = vmul.f32 %v33, %v52
  %v70 = vmul.f32 %v34, %v57
  %v71 = vmul.f32 %v35, %v62
  %v72 = vmul.f32 %v36, %v67
  %vm73 = vcmask 130048
  %v74 = vsel %vm73, %v69, 0.0
  %v75 = vsel %vm73, %v70, 0.0
  %v76 = vadd.f32 %v74, %v75
  %v77 = vsel %vm73, %v71, 0.0
  %v78 = vadd.f32 %v76, %v77
  %vm79 = vcmask 128000
  %v80 = vsel %vm79, %v72, 0.0
  %v81 = vadd.f32 %v78, %v80
  %v82 = vrot.slane %v81, 4
  %v83 = vadd.f32 %v81, %v82
  %v84 = vrot.slane %v83, 2
  %v85 = vadd.f32 %v83, %v84
  %v86 = vrot.slane %v85, 1
  %v87 = vadd.f32 %v85, %v86
  %v88 = vlaneseq
  %vm89 = vcmp.ge.s32.totalorder %v88, 0
  %vm90 = vcmp.lt.s32.totalorder %v88, 16
  %vm91 = vmand %vm89, %vm90
  %92 = vst.msk [vmem:[%s2] sm:$0x1] %vm91, %v87
  // Predicated region
  $region10: #{augmentation_dot_product.1} parent=0 // pred_check
    _
  $region11: #{augmentation_dot_product.1} parent=0 // pred_check_branch
    %94 = sbr.rel (0) target = $region13
  $region12: #{augmentation_dot_product.1} parent=0 // pred_region
    _
  $region13: #{augmentation_dot_product.1} parent=0 // pred_fallthru
    _
  // Predicated region
  $region14: #{augmentation_dot_product.1} parent=0 // pred_check
    _
  $region15: #{augmentation_dot_product.1} parent=0 // pred_check_branch
    %96 = sbr.rel (0) target = $region17
  $region16: #{augmentation_dot_product.1} parent=0 // pred_region
    _
  $region17: #{augmentation_dot_product.1} parent=0 // pred_fallthru
    _

</llo_original>
